<compile_context>
chip_gen: v7x
topology: tpu7x:2x2x1
jax: 0.10.0
libtpu: 0.0.40
codegen_flags: <defaults>
</compile_context>

<pallas_src>
import jax
import jax.numpy as jnp
from jax.experimental import pallas as pl
from jax.experimental.pallas import tpu as pltpu


def _round_up(x: int, m: int) -> int:
    return ((x + m - 1) // m) * m


def _pad2d(arr, rows: int, cols: int):
    pr = rows - arr.shape[0]
    pc = cols - arr.shape[1]
    if pr or pc:
        arr = jnp.pad(arr, ((0, pr), (0, pc)))
    return arr


def _sublane_multiple(dtype) -> int:
    # f32 -> 8, bf16 -> 16, int8/fp8 -> 32 (packed-sublane layouts).
    return max(8, 32 // jnp.dtype(dtype).itemsize)


def _lane_align(dim: int) -> int:
    # 256-aligned tiles feed the 2x256^2 MXU on v6e/v7x with no half-empty
    # passes; 128 keeps small dims legal (and matches v5e's 4x128^2 MXU).
    return 256 if dim >= 256 else 128


# ---------------------------------------------------------------------------
# Kernels.  Per grid step (i, j, k) the tiles are:
#   x: (tm, tk)   W: (tk, tn)   XB = x @ B: (tm, r)   A^T: (r, tn)
# The hoisted LoRA up-projection (tm, r) @ (r, tn) seeds the accumulator once
# per output tile (k == 0); the base path accumulates x @ W across k.
# ---------------------------------------------------------------------------

def _lora_kernel_direct(x_ref, w_ref, xb_ref, at_ref, o_ref):
    """f32 output: accumulate directly into o_ref (no scratch, no epilogue copy)."""
    k = pl.program_id(2)

    @pl.when(k == 0)
    def _init():
        o_ref[...] = jnp.dot(xb_ref[...], at_ref[...],
                             preferred_element_type=jnp.float32)

    o_ref[...] += jnp.dot(x_ref[...], w_ref[...],
                          preferred_element_type=jnp.float32)


def _lora_kernel_acc(x_ref, w_ref, xb_ref, at_ref, o_ref, acc_ref):
    """Narrow (e.g. bf16) output: f32 VMEM accumulator, cast on the last k step."""
    k = pl.program_id(2)

    @pl.when(k == 0)
    def _init():
        acc_ref[...] = jnp.dot(xb_ref[...], at_ref[...],
                               preferred_element_type=jnp.float32)

    acc_ref[...] += jnp.dot(x_ref[...], w_ref[...],
                            preferred_element_type=jnp.float32)

    @pl.when(k == pl.num_programs(2) - 1)
    def _fin():
        o_ref[...] = acc_ref[...].astype(o_ref.dtype)


def lora_forward(x, W, B, A, *, tm=None, tn=None, tk=None, compute_dtype=None):
    """Pallas implementation of LoRAWrapper.forward.

    x: (..., d1)  W: (d1, d2)  B: (d1, r)  A: (d2, r)  ->  (..., d2)
    Pass the override (a, b) tensors as A, B to get the `forward(x, a, b)` path.
    compute_dtype: optionally cast streamed operands (e.g. jnp.bfloat16) for
    MXU-peak throughput; accumulation stays f32, output keeps x.dtype.
    """
    d1, d2 = W.shape
    r = A.shape[-1]
    lead = x.shape[:-1]
    out_dtype = x.dtype

    x2d = x.reshape(-1, d1)
    M = x2d.shape[0]

    cdtype = jnp.dtype(compute_dtype) if compute_dtype is not None else jnp.dtype(x.dtype)
    in_itemsize = cdtype.itemsize
    out_itemsize = jnp.dtype(out_dtype).itemsize

    # --- LoRA down-projection precomputed once in the wrapper (tiny (M,r) GEMM).
    prec = jax.lax.Precision.HIGHEST if x2d.dtype == jnp.float32 else None
    xb = jnp.dot(x2d, B.astype(x2d.dtype), precision=prec,
                 preferred_element_type=jnp.float32).astype(cdtype)
    a_t = A.T.astype(cdtype)                       # pre-transposed, lane-dense (r, d2)

    xc = x2d.astype(cdtype)
    Wc = W.astype(cdtype)

    # --- tile plan ---------------------------------------------------------
    sub = _sublane_multiple(cdtype)
    if tm is None:
        tm = 512
    tm_ = _round_up(min(tm, max(M, 1)), sub)
    single_m_tile = tm_ >= M
    decode_like = single_m_tile and M <= 256

    if tn is None:
        tn = 512
    if tk is None:
        tk = 512
        if decode_like:
            # HBM-bound regime: stream more of W per k step (fewer grid-step
            # overheads; ideally the whole of d1).
            tk = max(tk, 8192 // in_itemsize)      # 2048 f32 / 4096 bf16
    tk_ = _round_up(min(tk, d1), _lane_align(d1))
    tn_ = _round_up(min(tn, d2), _lane_align(d2))

    Mp = _round_up(M, tm_)
    Kp = _round_up(d1, tk_)
    Np = _round_up(d2, tn_)
    grid = (Mp // tm_, Np // tn_, Kp // tk_)

    # Zero-padding K/N is mathematically inert; padded M rows / N cols are
    # sliced away after the call.
    xp = _pad2d(xc, Mp, Kp)
    Wp = _pad2d(Wc, Kp, Np)
    xbp = _pad2d(xb, Mp, r)
    atp = _pad2d(a_t, r, Np)

    # Decode-like shapes are HBM-bound streaming W: deepen W's pipeline.
    w_buffers = 3 if (grid[0] == 1 and grid[2] > 1 and decode_like) else 2
    w_spec_kwargs = {}
    if w_buffers == 3:
        w_spec_kwargs["pipeline_mode"] = pl.Buffered(3)

    use_direct = jnp.dtype(out_dtype) == jnp.float32
    kernel = _lora_kernel_direct if use_direct else _lora_kernel_acc
    scratch_shapes = [] if use_direct else [pltpu.VMEM((tm_, tn_), jnp.float32)]

    # --- VMEM budget (generation-aware) -------------------------------------
    tile_bytes = in_itemsize * (2 * tm_ * tk_            # x, double-buffered
                                + w_buffers * tk_ * tn_  # W
                                + 2 * tm_ * r            # x @ B
                                + 2 * r * tn_)           # A^T
    tile_bytes += 2 * tm_ * tn_ * out_itemsize           # output, double-buffered
    if not use_direct:
        tile_bytes += tm_ * tn_ * 4                      # f32 accumulator scratch
    try:
        vmem_cap = int(getattr(pltpu.get_tpu_info(), "vmem_capacity_bytes",
                               64 * 1024 * 1024))
    except Exception:                                    # pragma: no cover
        vmem_cap = 64 * 1024 * 1024                      # v7x worst case
    vmem_limit = None
    if tile_bytes > 12 * 1024 * 1024:
        vmem_limit = min(2 * tile_bytes, (vmem_cap * 3) // 4)

    # Advisory cost estimate; bytes_accessed counts re-streaming.
    flops = 2 * M * d1 * d2 + 2 * M * r * d2
    bytes_accessed = int(
        in_itemsize * (xp.size * grid[1]      # x re-read per output-column tile
                       + Wp.size * grid[0]    # W re-read per output-row tile
                       + xbp.size
                       + atp.size * grid[0])
        + out_itemsize * Mp * Np)

    out = pl.pallas_call(
        kernel,
        out_shape=jax.ShapeDtypeStruct((Mp, Np), out_dtype),
        grid_spec=pltpu.PrefetchScalarGridSpec(
            num_scalar_prefetch=0,
            grid=grid,
            in_specs=[
                pl.BlockSpec((tm_, tk_), lambda i, j, k: (i, k)),      # x tile
                pl.BlockSpec((tk_, tn_), lambda i, j, k: (k, j),
                             **w_spec_kwargs),                         # W tile
                pl.BlockSpec((tm_, r), lambda i, j, k: (i, 0)),        # x @ B (per i)
                pl.BlockSpec((r, tn_), lambda i, j, k: (0, j)),        # A^T (per j)
            ],
            out_specs=pl.BlockSpec((tm_, tn_), lambda i, j, k: (i, j)),
            scratch_shapes=scratch_shapes,
        ),
        compiler_params=pltpu.CompilerParams(
            dimension_semantics=("parallel", "parallel", "arbitrary"),
            vmem_limit_bytes=vmem_limit,
        ),
        cost_estimate=pl.CostEstimate(
            flops=int(flops), transcendentals=0, bytes_accessed=bytes_accessed),
    )(xp, Wp, xbp, atp)

    out = out[:M, :d2]
    return out.reshape(*lead, d2)


def _reference(x, W, B, A):
    hp = jax.lax.Precision.HIGHEST
    return (jnp.matmul(jnp.matmul(x, B, precision=hp), A.T, precision=hp)
            + jnp.matmul(x, W, precision=hp))


if __name__ == "__main__":
    # Small shapes consistent with the forward: batch=2, seq=8, d1=32, d2=32, r=4
    batch, seq, d1, d2, rank = 2, 8, 32, 32, 4

    key = jax.random.PRNGKey(0)
    (kx, kw, kb, ka_o, kb_o, kx2, kw2, kb2, ka2, kx4, kw4, k5) = jax.random.split(key, 12)

    x = jax.random.normal(kx, (batch, seq, d1), dtype=jnp.float32)
    W = jax.random.normal(kw, (d1, d2), dtype=jnp.float32) * 0.05
    A = jnp.zeros((d2, rank), dtype=jnp.float32)               # module init: A = zeros
    B = jax.random.normal(kb, (d1, rank), dtype=jnp.float32)   # module init: B ~ N(0,1)

    # ---- default path: x @ B @ A.T + x @ W ----
    out = jax.block_until_ready(lora_forward(x, W, B, A))
    assert out.shape == (batch, seq, d2)
    assert jnp.allclose(out, _reference(x, W, B, A), atol=1e-4, rtol=1e-4), \
        "default path mismatch"

    # ---- override path: forward(x, a, b) -> x @ b @ a.T + x @ W ----
    a_ovr = jax.random.normal(ka_o, (d2, rank), dtype=jnp.float32) * 0.1
    b_ovr = jax.random.normal(kb_o, (d1, rank), dtype=jnp.float32) * 0.1
    out2 = jax.block_until_ready(lora_forward(x, W, b_ovr, a_ovr))
    assert jnp.allclose(out2, _reference(x, W, b_ovr, a_ovr), atol=1e-4, rtol=1e-4), \
        "override path mismatch"

    # ---- multi-tile path: grid (3, 2, 2); exercises k accumulation, the
    #      hoisted LoRA seed, and wrapper padding (f32 direct-accumulate) ----
    B2b, S2, D1, D2, R = 2, 72, 384, 512, 8
    x2 = jax.random.normal(kx2, (B2b, S2, D1), dtype=jnp.float32) * 0.1
    W2 = jax.random.normal(kw2, (D1, D2), dtype=jnp.float32) * 0.05
    B2 = jax.random.normal(kb2, (D1, R), dtype=jnp.float32) * 0.1
    A2 = jax.random.normal(ka2, (D2, R), dtype=jnp.float32) * 0.1
    out3 = jax.block_until_ready(lora_forward(x2, W2, B2, A2, tm=64, tn=256, tk=256))
    assert out3.shape == (B2b, S2, D2)
    assert jnp.allclose(out3, _reference(x2, W2, B2, A2), atol=1e-3, rtol=1e-3), \
        "tiled path mismatch"

    # ---- decode-like path: single M tile, auto-large tk, Buffered(3) W ----
    x4 = jax.random.normal(kx4, (2, 4, 4096), dtype=jnp.float32) * 0.05
    W4 = jax.random.normal(kw4, (4096, 512), dtype=jnp.float32) * 0.02
    B4 = jax.random.normal(kb_o, (4096, R), dtype=jnp.float32) * 0.05
    A4 = jax.random.normal(ka_o, (512, R), dtype=jnp.float32) * 0.1
    out4 = jax.block_until_ready(lora_forward(x4, W4, B4, A4))
    assert out4.shape == (2, 4, 512)
    assert jnp.allclose(out4, _reference(x4, W4, B4, A4), atol=1e-3, rtol=1e-3), \
        "decode path mismatch"

    # ---- bf16 paths ----
    k5x, k5w, k5b, k5a = jax.random.split(k5, 4)
    x5 = jax.random.normal(k5x, (2, 16, 256), dtype=jnp.float32) * 0.1
    W5 = jax.random.normal(k5w, (256, 256), dtype=jnp.float32) * 0.06
    B5 = jax.random.normal(k5b, (256, 8), dtype=jnp.float32) * 0.1
    A5 = jax.random.normal(k5a, (256, 8), dtype=jnp.float32) * 0.1
    ref5 = _reference(x5, W5, B5, A5)

    # (a) f32 in/out, bf16 compute (direct-accumulate kernel on the bf16 MXU path)
    out5a = jax.block_until_ready(
        lora_forward(x5, W5, B5, A5, compute_dtype=jnp.bfloat16))
    assert jnp.allclose(out5a, ref5, atol=2e-2, rtol=2e-2), "bf16-compute path mismatch"

    # (b) bf16 end-to-end (f32-scratch-accumulator kernel)
    x5b, W5b = x5.astype(jnp.bfloat16), W5.astype(jnp.bfloat16)
    B5b, A5b = B5.astype(jnp.bfloat16), A5.astype(jnp.bfloat16)
    out5b = jax.block_until_ready(lora_forward(x5b, W5b, B5b, A5b))
    ref5b = _reference(x5b.astype(jnp.float32), W5b.astype(jnp.float32),
                       B5b.astype(jnp.float32), A5b.astype(jnp.float32))
    assert jnp.allclose(out5b.astype(jnp.float32), ref5b, atol=2e-2, rtol=2e-2), \
        "bf16 end-to-end path mismatch"

    print("KERNEL_OK")
</pallas_src>

<mosaic_0001>
module attributes {stable_mosaic.version = 11 : i64} {
  func.func @_lora_kernel_direct(%arg0: i32, %arg1: i32, %arg2: i32, %arg3: memref<16x128xf32, #tpu.memory_space<vmem>>, %arg4: memref<128x128xf32, #tpu.memory_space<vmem>>, %arg5: memref<16x4xf32, #tpu.memory_space<vmem>>, %arg6: memref<4x128xf32, #tpu.memory_space<vmem>>, %arg7: memref<16x128xf32, #tpu.memory_space<vmem>>) attributes {dimension_semantics = [#tpu.dimension_semantics<parallel>, #tpu.dimension_semantics<parallel>, #tpu.dimension_semantics<arbitrary>], iteration_bounds = array<i64: 1, 1, 1>, scalar_prefetch = 0 : i64, scratch_operands = 0 : i64, tpu.core_type = #tpu.core_type<tc>, window_params = [{transform_indices = @transform_0, window_bounds = array<i64: 16, 128>}, {transform_indices = @transform_1, window_bounds = array<i64: 128, 128>}, {transform_indices = @transform_2, window_bounds = array<i64: 16, 4>}, {transform_indices = @transform_3, window_bounds = array<i64: 4, 128>}, {transform_indices = @transform_4, window_bounds = array<i64: 16, 128>}]} {
    %c0_i32 = arith.constant 0 : i32
    %0 = arith.cmpi eq, %arg2, %c0_i32 : i32
    %1 = arith.extui %0 : i1 to i32
    %c0_i32_0 = arith.constant 0 : i32
    %2 = arith.cmpi ne, %1, %c0_i32_0 : i32
    scf.if %2 {
      %c0_8 = arith.constant 0 : index
      %c0_9 = arith.constant 0 : index
      %9 = vector.load %arg5[%c0_8, %c0_9] : memref<16x4xf32, #tpu.memory_space<vmem>>, vector<16x4xf32>
      %c0_10 = arith.constant 0 : index
      %c0_11 = arith.constant 0 : index
      %10 = vector.load %arg6[%c0_10, %c0_11] : memref<4x128xf32, #tpu.memory_space<vmem>>, vector<4x128xf32>
      %cst_12 = arith.constant dense<0.000000e+00> : vector<16x128xf32>
      %11 = tpu.matmul %9, %10, %cst_12 {dimension_numbers = #tpu.dot_dimension_numbers<[1], [0], [0], [1], [0, 0, 1, 1], [], []>} : vector<16x4xf32>, vector<4x128xf32>, vector<16x128xf32> -> vector<16x128xf32>
      %c0_13 = arith.constant 0 : index
      %c0_14 = arith.constant 0 : index
      %12 = vector.load %arg7[%c0_13, %c0_14] : memref<16x128xf32, #tpu.memory_space<vmem>>, vector<16x128xf32>
      tpu.vector_store %arg7[%c0_13, %c0_14], %11 {strides = array<i32>} : memref<16x128xf32, #tpu.memory_space<vmem>>, vector<16x128xf32>,
    } else {
    }
    %c0 = arith.constant 0 : index
    %c0_1 = arith.constant 0 : index
    %3 = vector.load %arg7[%c0, %c0_1] : memref<16x128xf32, #tpu.memory_space<vmem>>, vector<16x128xf32>
    %c0_2 = arith.constant 0 : index
    %c0_3 = arith.constant 0 : index
    %4 = vector.load %arg3[%c0_2, %c0_3] : memref<16x128xf32, #tpu.memory_space<vmem>>, vector<16x128xf32>
    %c0_4 = arith.constant 0 : index
    %c0_5 = arith.constant 0 : index
    %5 = vector.load %arg4[%c0_4, %c0_5] : memref<128x128xf32, #tpu.memory_space<vmem>>, vector<128x128xf32>
    %cst = arith.constant dense<0.000000e+00> : vector<16x128xf32>
    %6 = tpu.matmul %4, %5, %cst {dimension_numbers = #tpu.dot_dimension_numbers<[1], [0], [0], [1], [0, 0, 1, 1], [], []>} : vector<16x128xf32>, vector<128x128xf32>, vector<16x128xf32> -> vector<16x128xf32>
    %7 = arith.addf %3, %6 : vector<16x128xf32>
    %c0_6 = arith.constant 0 : index
    %c0_7 = arith.constant 0 : index
    %8 = vector.load %arg7[%c0_6, %c0_7] : memref<16x128xf32, #tpu.memory_space<vmem>>, vector<16x128xf32>
    tpu.vector_store %arg7[%c0_6, %c0_7], %7 {strides = array<i32>} : memref<16x128xf32, #tpu.memory_space<vmem>>, vector<16x128xf32>,
    return
  }
  func.func @transform_0(%arg0: i32, %arg1: i32, %arg2: i32) -> (i32, i32) {
    %c0_i32 = arith.constant 0 : i32
    return %arg0, %arg2 : i32, i32
  }
  func.func @transform_1(%arg0: i32, %arg1: i32, %arg2: i32) -> (i32, i32) {
    %c0_i32 = arith.constant 0 : i32
    return %arg2, %arg1 : i32, i32
  }
  func.func @transform_2(%arg0: i32, %arg1: i32, %arg2: i32) -> (i32, i32) {
    %c0_i32 = arith.constant 0 : i32
    %c0_i32_0 = arith.constant 0 : i32
    return %arg0, %c0_i32 : i32, i32
  }
  func.func @transform_3(%arg0: i32, %arg1: i32, %arg2: i32) -> (i32, i32) {
    %c0_i32 = arith.constant 0 : i32
    %c0_i32_0 = arith.constant 0 : i32
    return %c0_i32, %arg1 : i32, i32
  }
  func.func @transform_4(%arg0: i32, %arg1: i32, %arg2: i32) -> (i32, i32) {
    %c0_i32 = arith.constant 0 : i32
    return %arg0, %arg1 : i32, i32
  }
}

</mosaic_0001>

<llo_original>
// kernel: tpu_custom_call.1
$region0: #{tpu_custom_call.1}
  #allocation0 [shape = 'u32[]', space=smem, size = 0x4, offset = 0x4, fixed_abs, tag = 'smem constant byte address 0x4 - core index']
  #allocation1 [shape = 'u32[144,128]{1,0:T(1,128)}', space=vmem, size = 0x12000, scoped, tag = 'internal scratch']
  %s0 = inlined_call_operand.vmem [shape: f32[16,128], index: 0, kind: input, shape index: {}]
  %s1 = inlined_call_operand.hbm [shape: f32[128,128], index: 1, kind: input, shape index: {}]
  %s2 = inlined_call_operand.vmem [shape: f32[16,4], index: 2, kind: input, shape index: {}]
  %s3 = inlined_call_operand.vmem [shape: f32[4,128], index: 3, kind: input, shape index: {}]
  %s4 = inlined_call_operand.hbm [shape: f32[16,128], index: 4, kind: output, shape index: {}]
  %s5 = sld [smem:[#allocation0]]
  $region34: #{tpu_custom_call.1} parent=0
    _
  %s7 = ssub.s32 1, %s5
  %s8 = scalar_select 0, %s7, %s5
  $region1: #{tpu_custom_call.1} parent=0
    #allocation2 [shape = 'u8[65536]{0}', space=vmem, size = 0x10000, scoped, tag = 'input window, operand 1, single buffered']
    #allocation3 [shape = 's32[1]{0}', space=sflag, size = 0x4, scoped, tag = 'scoped memory for tpu_custom_call.1']
    #allocation4 [shape = 's32[1]{0}', space=sflag, size = 0x4, scoped, tag = 'scoped memory for tpu_custom_call.1']
    #allocation5 [shape = 'u8[8192]{0}', space=vmem, size = 0x2000, scoped, tag = 'output window, operand 0, single buffered']
    %9 = vsyncpa [#allocation3], 0
    %10 = vsyncpa [#allocation4], 0
    // Predicated region
    $region2: #{tpu_custom_call.1} parent=1 // pred_check
      _
    $region3: #{tpu_custom_call.1} parent=1 // pred_check_branch
      %12 = sbr.rel (0) target = $region5
    $region4: #{tpu_custom_call.1} parent=1 // pred_region
      _
    $region5: #{tpu_custom_call.1} parent=1 // pred_fallthru
      _
    // Predicated region
    $region6: #{tpu_custom_call.1} parent=1 // pred_check
      _
    $region7: #{tpu_custom_call.1} parent=1 // pred_check_branch
      %14 = sbr.rel (0) target = $region9
    $region8: #{tpu_custom_call.1} parent=1 // pred_region
      %s16 = ssub.s32 2048, 2048
      %17 = vsyncadd [#allocation3], %s16
      %s18 = sshll.u32 [#allocation2], 4
      %s19 = int_to_ptr.vmem [resolvable:$true] %s18
      %24 = dma.hbm_to_vmem [thread:$0]  %s1, 2048, %s19, [#allocation3], 128, 128, 8
    $region9: #{tpu_custom_call.1} parent=1 // pred_fallthru
      _
    // Predicated region
    $region10: #{tpu_custom_call.1} parent=1 // pred_check
      _
    $region11: #{tpu_custom_call.1} parent=1 // pred_check_branch
      %26 = sbr.rel (0) target = $region13
    $region12: #{tpu_custom_call.1} parent=1 // pred_region
      _
    $region13: #{tpu_custom_call.1} parent=1 // pred_fallthru
      _
    // Predicated region
    $region14: #{tpu_custom_call.1} parent=1 // pred_check
      _
    $region15: #{tpu_custom_call.1} parent=1 // pred_check_branch
      %28 = sbr.rel (0) target = $region17
    $region16: #{tpu_custom_call.1} parent=1 // pred_region
      _
    $region17: #{tpu_custom_call.1} parent=1 // pred_fallthru
      _
    // Predicated region
    $region18: #{tpu_custom_call.1} parent=1 // pred_check
      _
    $region19: #{tpu_custom_call.1} parent=1 // pred_check_branch
      %30 = sbr.rel (0) target = $region21
    $region20: #{tpu_custom_call.1} parent=1 // pred_region
      %31 = dma.done [#allocation3], 2048
    $region21: #{tpu_custom_call.1} parent=1 // pred_fallthru
      _
    %p32 = scmp.eq.s32.totalorder 0, 0
    // Predicated region
    $region22: #{tpu_custom_call.1} parent=1 // pred_check
      %p33 = pneg %p32
    $region23: #{tpu_custom_call.1} parent=1 // pred_check_branch
      %35 = sbr.rel (%p33) target = $region25
    $region24: #{tpu_custom_call.1} parent=1 // pred_region
      %v36 = vld [vmem:[%s2] sm:$0xff]
      %v37 = vld [vmem:[%s2 + $0x8] sm:$0xff]
      %v38 = vld [vmem:[%s3] sm:$0xf]
      %vm39 = vcmask 31744
      %v41 = vsel %vm39, %v36, 0
      %v44 = vsel %vm39, %v37, 0
      %vm46 = vcmask 1043456
      %v48 = vsel %vm46, %v38, 0
      %50 = vmatprep.subr.mxu0 0.0
      %51 = vmatpush1.msra.mxu0 %v48
      %52 = vmatprep.subr.mxu0 0.0
      %53 = vmatpush1.msra.mxu0 0.0
      %54 = vmatprep.subr.mxu0 0.0
      %55 = vmatpush1.msra.mxu0 0.0
      %56 = vmatprep.subr.mxu0 0.0
      %57 = vmatpush1.msra.mxu0 0.0
      %58 = vmatprep.subr.mxu0 0.0
      %59 = vmatpush1.msra.mxu0 0.0
      %60 = vmatprep.subr.mxu0 0.0
      %61 = vmatpush1.msra.mxu0 0.0
      %62 = vmatprep.subr.mxu0 0.0
      %63 = vmatpush1.msra.mxu0 0.0
      %64 = vmatprep.subr.mxu0 0.0
      %65 = vmatpush1.msra.mxu0 0.0
      %66 = vmatprep.subr.mxu0 0.0
      %67 = vmatpush1.msra.mxu0 0.0
      %68 = vmatprep.subr.mxu0 0.0
      %69 = vmatpush1.msra.mxu0 0.0
      %70 = vmatprep.subr.mxu0 0.0
      %71 = vmatpush1.msra.mxu0 0.0
      %72 = vmatprep.subr.mxu0 0.0
      %73 = vmatpush1.msra.mxu0 0.0
      %74 = vmatprep.subr.mxu0 0.0
      %75 = vmatpush1.msra.mxu0 0.0
      %76 = vmatprep.subr.mxu0 0.0
      %77 = vmatpush1.msra.mxu0 0.0
      %78 = vmatprep.subr.mxu0 0.0
      %79 = vmatpush1.msra.mxu0 0.0
      %80 = vmatprep.subr.mxu0 0.0
      %81 = vmatpush1.msra.mxu0 0.0
      %82 = vmatprep.subr.mxu0 0.0
      %83 = vmatpush1.msra.mxu0 0.0
      %84 = vmatprep.subr.mxu0 0.0
      %85 = vmatpush1.msra.mxu0 0.0
      %86 = vmatprep.subr.mxu0 0.0
      %87 = vmatpush1.msra.mxu0 0.0
      %88 = vmatprep.subr.mxu0 0.0
      %89 = vmatpush1.msra.mxu0 0.0
      %90 = vmatprep.subr.mxu0 0.0
      %91 = vmatpush1.msra.mxu0 0.0
      %92 = vmatprep.subr.mxu0 0.0
      %93 = vmatpush1.msra.mxu0 0.0
      %94 = vmatprep.subr.mxu0 0.0
      %95 = vmatpush1.msra.mxu0 0.0
      %96 = vmatprep.subr.mxu0 0.0
      %97 = vmatpush1.msra.mxu0 0.0
      %98 = vmatprep.subr.mxu0 0.0
      %99 = vmatpush1.msra.mxu0 0.0
      %100 = vmatprep.subr.mxu0 0.0
      %101 = vmatpush1.msra.mxu0 0.0
      %102 = vmatprep.subr.mxu0 0.0
      %103 = vmatpush1.msra.mxu0 0.0
      %104 = vmatprep.subr.mxu0 0.0
      %105 = vmatpush1.msra.mxu0 0.0
      %106 = vmatprep.subr.mxu0 0.0
      %107 = vmatpush1.msra.mxu0 0.0
      %108 = vmatprep.subr.mxu0 0.0
      %109 = vmatpush1.msra.mxu0 0.0
      %110 = vmatprep.subr.mxu0 0.0
      %111 = vmatpush1.msra.mxu0 0.0
      %112 = vmatprep.subr.mxu0 0.0
      %113 = vmatpush1.msra.mxu0 0.0
      %114 = vmatprep.mubr.f32.mxu0 0.0
      %115 = vmatmul.mubr.f32.gmra.mrb[0].mxu0 %v41
      %v116 = vpop.f32.mrb[0].mxu0
      %v117 = vadd.f32 0.0, %v116
      %v118 = vpop.f32.mrb[0].mxu0
      %119 = vmatprep.mubr.f32.mxu0 0.0
      %120 = vmatmul.mubr.f32.gmra.mrb[0].mxu0 %v44
      %v121 = vpop.f32.mrb[0].mxu0
      %v122 = vadd.f32 0.0, %v121
      %v123 = vpop.f32.mrb[0].mxu0
      %124 = vdwg.mxu0
      %125 = vst [vmem:[#allocation5] sm:$0xff] %v117
      %126 = vst [vmem:[#allocation5 + $0x8] sm:$0xff] %v122
    $region25: #{tpu_custom_call.1} parent=1 // pred_fallthru
      _
    %v127 = vld [vmem:[#allocation5] sm:$0xff]
    %v128 = vld [vmem:[#allocation5 + $0x8] sm:$0xff]
    %v129 = vld [vmem:[%s0] sm:$0xff]
    %v130 = vld [vmem:[%s0 + $0x8] sm:$0xff]
    %v131 = vld [vmem:[#allocation2] sm:$0xff]
    %v132 = vld [vmem:[#allocation2 + $0x8] sm:$0xff]
    %v133 = vld [vmem:[#allocation2 + $0x10] sm:$0xff]
    %v134 = vld [vmem:[#allocation2 + $0x18] sm:$0xff]
    %v135 = vld [vmem:[#allocation2 + $0x20] sm:$0xff]
    %v136 = vld [vmem:[#allocation2 + $0x28] sm:$0xff]
    %v137 = vld [vmem:[#allocation2 + $0x30] sm:$0xff]
    %v138 = vld [vmem:[#allocation2 + $0x38] sm:$0xff]
    %v139 = vld [vmem:[#allocation2 + $0x40] sm:$0xff]
    %v140 = vld [vmem:[#allocation2 + $0x48] sm:$0xff]
    %v141 = vld [vmem:[#allocation2 + $0x50] sm:$0xff]
    %v142 = vld [vmem:[#allocation2 + $0x58] sm:$0xff]
    %v143 = vld [vmem:[#allocation2 + $0x60] sm:$0xff]
    %v144 = vld [vmem:[#allocation2 + $0x68] sm:$0xff]
    %v145 = vld [vmem:[#allocation2 + $0x70] sm:$0xff]
    %v146 = vld [vmem:[#allocation2 + $0x78] sm:$0xff]
    %147 = vmatprep.subr.mxu0 0.0
    %148 = vmatpush1.msra.mxu0 %v131
    %149 = vmatprep.subr.mxu0 0.0
    %150 = vmatpush1.msra.mxu0 %v132
    %151 = vmatprep.subr.mxu0 0.0
    %152 = vmatpush1.msra.mxu0 %v133
    %153 = vmatprep.subr.mxu0 0.0
    %154 = vmatpush1.msra.mxu0 %v134
    %155 = vmatprep.subr.mxu0 0.0
    %156 = vmatpush1.msra.mxu0 %v135
    %157 = vmatprep.subr.mxu0 0.0
    %158 = vmatpush1.msra.mxu0 %v136
    %159 = vmatprep.subr.mxu0 0.0
    %160 = vmatpush1.msra.mxu0 %v137
    %161 = vmatprep.subr.mxu0 0.0
    %162 = vmatpush1.msra.mxu0 %v138
    %163 = vmatprep.subr.mxu0 0.0
    %164 = vmatpush1.msra.mxu0 %v139
    %165 = vmatprep.subr.mxu0 0.0
    %166 = vmatpush1.msra.mxu0 %v140
    %167 = vmatprep.subr.mxu0 0.0
    %168 = vmatpush1.msra.mxu0 %v141
    %169 = vmatprep.subr.mxu0 0.0
    %170 = vmatpush1.msra.mxu0 %v142
    %171 = vmatprep.subr.mxu0 0.0
    %172 = vmatpush1.msra.mxu0 %v143
    %173 = vmatprep.subr.mxu0 0.0
    %174 = vmatpush1.msra.mxu0 %v144
    %175 = vmatprep.subr.mxu0 0.0
    %176 = vmatpush1.msra.mxu0 %v145
    %177 = vmatprep.subr.mxu0 0.0
    %178 = vmatpush1.msra.mxu0 %v146
    %179 = vmatprep.subr.mxu0 0.0
    %180 = vmatpush1.msra.mxu0 0.0
    %181 = vmatprep.subr.mxu0 0.0
    %182 = vmatpush1.msra.mxu0 0.0
    %183 = vmatprep.subr.mxu0 0.0
    %184 = vmatpush1.msra.mxu0 0.0
    %185 = vmatprep.subr.mxu0 0.0
    %186 = vmatpush1.msra.mxu0 0.0
    %187 = vmatprep.subr.mxu0 0.0
    %188 = vmatpush1.msra.mxu0 0.0
    %189 = vmatprep.subr.mxu0 0.0
    %190 = vmatpush1.msra.mxu0 0.0
    %191 = vmatprep.subr.mxu0 0.0
    %192 = vmatpush1.msra.mxu0 0.0
    %193 = vmatprep.subr.mxu0 0.0
    %194 = vmatpush1.msra.mxu0 0.0
    %195 = vmatprep.subr.mxu0 0.0
    %196 = vmatpush1.msra.mxu0 0.0
    %197 = vmatprep.subr.mxu0 0.0
    %198 = vmatpush1.msra.mxu0 0.0
    %199 = vmatprep.subr.mxu0 0.0
    %200 = vmatpush1.msra.mxu0 0.0
    %201 = vmatprep.subr.mxu0 0.0
    %202 = vmatpush1.msra.mxu0 0.0
    %203 = vmatprep.subr.mxu0 0.0
    %204 = vmatpush1.msra.mxu0 0.0
    %205 = vmatprep.subr.mxu0 0.0
    %206 = vmatpush1.msra.mxu0 0.0
    %207 = vmatprep.subr.mxu0 0.0
    %208 = vmatpush1.msra.mxu0 0.0
    %209 = vmatprep.subr.mxu0 0.0
    %210 = vmatpush1.msra.mxu0 0.0
    %211 = vmatprep.mubr.f32.mxu0 0.0
    %212 = vmatmul.mubr.f32.gmra.mrb[0].mxu0 %v129
    %v213 = vpop.f32.mrb[0].mxu0
    %v214 = vadd.f32 0.0, %v213
    %v215 = vpop.f32.mrb[0].mxu0
    %216 = vmatprep.mubr.f32.mxu0 0.0
    %217 = vmatmul.mubr.f32.gmra.mrb[0].mxu0 %v130
    %v218 = vpop.f32.mrb[0].mxu0
    %v219 = vadd.f32 0.0, %v218
    %v220 = vpop.f32.mrb[0].mxu0
    %221 = vdwg.mxu0
    %v222 = vadd.f32 %v127, %v214
    %v223 = vadd.f32 %v128, %v219
    %224 = vst [vmem:[#allocation5] sm:$0xff] %v222
    %225 = vst [vmem:[#allocation5 + $0x8] sm:$0xff] %v223
    // Predicated region
    $region26: #{tpu_custom_call.1} parent=1 // pred_check
      _
    $region27: #{tpu_custom_call.1} parent=1 // pred_check_branch
      %227 = sbr.rel (0) target = $region29
    $region28: #{tpu_custom_call.1} parent=1 // pred_region
      %s229 = ssub.s32 256, 256
      %230 = vsyncadd [#allocation4], %s229
      %s231 = sshll.u32 [#allocation5], 4
      %s232 = int_to_ptr.vmem [resolvable:$true] %s231
      %237 = dma.vmem_to_hbm [thread:$0]  %s232, 256, %s4, [#allocation4], 128, 128, 8
    $region29: #{tpu_custom_call.1} parent=1 // pred_fallthru
      _
    // Predicated region
    $region30: #{tpu_custom_call.1} parent=1 // pred_check
      _
    $region31: #{tpu_custom_call.1} parent=1 // pred_check_branch
      %239 = sbr.rel (0) target = $region33
    $region32: #{tpu_custom_call.1} parent=1 // pred_region
      %240 = dma.done [#allocation4], 256
    $region33: #{tpu_custom_call.1} parent=1 // pred_fallthru
      _
    %241 = vsyncpa [#allocation3], 1
    %242 = vsyncpa [#allocation4], 1

</llo_original>
